<compile_context>
chip_gen: v6e
topology: v6e:2x2x1
jax: 0.10.0
libtpu: 0.0.40
codegen_flags: <defaults>
</compile_context>

<pallas_src>
import jax
import jax.numpy as jnp
from jax.experimental import pallas as pl
from jax.experimental.pallas import tpu as pltpu


_BLOCK_BYTES_TARGET = 8 * 1024 * 1024   # in+out bytes per grid step (x2 when double-buffered)
_MIN_SPLIT_BYTES = 256 * 1024           # only split a 1-step grid (v7x megacore) above this size
_VMEM_LIMIT_BYTES = 40 * 1024 * 1024    # < 64 MiB physical on v7x, far under 128 MiB on v5e/v6e


def _make_unpack_scale_kernel(num_channels: int):
    """Kernel: packed int32 pixels (1, TH, TW) -> float32 planes (1, C, TH, TW)."""

    def kernel(u_ref, o_ref):
        u = u_ref[0]                              # (TH, TW) int32; channel c = bits [8c, 8c+8)
        inv255 = jnp.float32(1.0 / 255.0)         # mul-by-reciprocal: <= 1 ulp vs /255.0
        for c in range(num_channels):             # static unroll, C <= 4
            byte_c = (u >> (8 * c)) & 0xFF        # VPU shift + mask, no cross-lane work
            o_ref[0, c] = byte_c.astype(jnp.float32) * inv255

    return kernel


def _ceil_div(a: int, b: int) -> int:
    return -(-a // b)


def _pick_tiles(N: int, H: int, W: int, C: int) -> tuple[int, int]:
    """Pick (row-tile, lane-tile) so one (input + output) block is ~_BLOCK_BYTES_TARGET.

    Row tiles are a multiple of 8 (or the full H); lane tiles are the full W or a
    multiple of 128.  Bytes-based so wide images never blow the VMEM limit.
    """
    px_bytes = 4 * (1 + C)            # 4 B packed int32 in + 4*C B f32 out per pixel
    row_bytes = px_bytes * W

    if 8 * row_bytes <= _BLOCK_BYTES_TARGET:
        # Common case: full-width rows (lane dim == full array dim, always legal).
        tw = W
        th_budget = max(8, (_BLOCK_BYTES_TARGET // row_bytes) // 8 * 8)
        th = H if (H <= 8 or th_budget >= H) else th_budget
    else:
        # Extremely wide rows: also tile the lane dim (must be a multiple of 128).
        th = H if H < 8 else 8
        tw = (_BLOCK_BYTES_TARGET // (th * px_bytes)) // 128 * 128
        if tw >= W:
            tw = W
        elif tw < 128:
            # TODO(synk): support multi-hundred-MiB single rows by shrinking the
            # per-step target per chip generation instead of erroring out.
            raise ValueError("image rows too wide for the VMEM block budget")

    # v7x has two TensorCores sharing HBM bandwidth; make sure a single large
    # image still produces >= 2 parallel grid steps so both cores get work.
    # Harmless (~0.35 us extra step) on single-core v5e/v6e; skipped for tiny images.
    steps = N * _ceil_div(H, th) * _ceil_div(W, tw)
    if steps < 2 and H >= 16 and N * H * W * px_bytes >= _MIN_SPLIT_BYTES:
        th = (_ceil_div(H, 2) + 7) // 8 * 8

    return th, tw


def _pil_to_tensor(images: jax.Array) -> jax.Array:
    """images: uint8 (N, H, W, C), 1 <= C <= 4  ->  float32 (N, C, H, W) in [0, 1]."""
    N, H, W, C = images.shape
    if C > 4:
        # TODO(synk): add a tiled fallback for exotic >4-channel inputs.
        raise ValueError("packed-byte path supports at most 4 channels")

    # Pack each pixel's channel bytes into one int32 word with explicit shifts.
    # XLA fuses the slices/converts/shifts/ors into ONE elementwise pass
    # (read C B/px, write 4 B/px); endianness-free by construction.
    x32 = images.astype(jnp.int32)
    packed = x32[..., 0]
    for c in range(1, C):
        packed = packed | (x32[..., c] << (8 * c))          # (N, H, W) int32

    th, tw = _pick_tiles(N, H, W, C)
    grid = (N, _ceil_div(H, th), _ceil_div(W, tw))

    return pl.pallas_call(
        _make_unpack_scale_kernel(C),
        out_shape=jax.ShapeDtypeStruct((N, C, H, W), jnp.float32),
        grid=grid,
        in_specs=[pl.BlockSpec((1, th, tw), lambda n, i, j: (n, i, j))],
        out_specs=pl.BlockSpec((1, C, th, tw), lambda n, i, j: (n, 0, i, j)),
        compiler_params=pltpu.CompilerParams(
            # All axes are independent -> megacore-shardable on v7x.
            dimension_semantics=("parallel", "parallel", "parallel"),
            vmem_limit_bytes=_VMEM_LIMIT_BYTES,
        ),
    )(packed)


def pil_to_numpy(image: jax.Array, like_to_tensor: bool = True) -> jax.Array:
    """JAX/Pallas equivalent of storch.transforms.pil_to_numpy.

    image: uint8 array, (H, W, C) or batched (N, H, W, C).
    Note: for thumbnail-sized inputs the pallas_call fixed cost dominates; batch
    many images on the leading axis (already supported) to amortize it.
    """
    image = jnp.asarray(image)
    if not like_to_tensor:
        # np.array(pil_image) with no conversion: identity on an array input.
        # (No Pallas identity kernel -- that would only double HBM traffic.)
        return image

    squeeze = image.ndim == 3
    if squeeze:
        image = image[None]
    out = _pil_to_tensor(image)
    return out[0] if squeeze else out


class PILToNumpy:
    """JAX/Pallas equivalent of storch.transforms.PILToNumpy."""

    def __init__(self, like_to_tensor: bool = True) -> None:
        self.like_to_tensor = like_to_tensor

    def __call__(self, image: jax.Array) -> jax.Array:
        return pil_to_numpy(image, self.like_to_tensor)


if __name__ == "__main__":
    key = jax.random.PRNGKey(0)
    k1, k2, k3, k4 = jax.random.split(key, 4)

    def ref_to_tensor(img):
        x = img.astype(jnp.float32) / 255.0
        if img.ndim == 3:
            return jnp.transpose(x, (2, 0, 1))
        return jnp.transpose(x, (0, 3, 1, 2))

    # 1) Single RGB image (the common PIL->np case).
    img = jax.random.randint(k1, (16, 16, 3), 0, 256, dtype=jnp.int32).astype(jnp.uint8)
    out = jax.block_until_ready(PILToNumpy(like_to_tensor=True)(img))
    assert out.shape == (3, 16, 16) and out.dtype == jnp.float32
    assert jnp.allclose(out, ref_to_tensor(img), atol=1e-6)

    # 2) Batched RGB images (leading parallel grid axis).
    batch = jax.random.randint(k2, (2, 24, 20, 3), 0, 256, dtype=jnp.int32).astype(jnp.uint8)
    out_b = jax.block_until_ready(pil_to_numpy(batch, like_to_tensor=True))
    assert out_b.shape == (2, 3, 24, 20) and out_b.dtype == jnp.float32
    assert jnp.allclose(out_b, ref_to_tensor(batch), atol=1e-6)

    # 3) RGBA images (4-channel path, exercises the high byte / sign handling).
    rgba = jax.random.randint(k3, (2, 16, 16, 4), 0, 256, dtype=jnp.int32).astype(jnp.uint8)
    out_a = jax.block_until_ready(pil_to_numpy(rgba, like_to_tensor=True))
    assert out_a.shape == (2, 4, 16, 16)
    assert jnp.allclose(out_a, ref_to_tensor(rgba), atol=1e-6)

    # 4) Larger single RGB image: exercises the >=2-step grid split (v7x megacore)
    #    and the W % 128 != 0 lane path (W = 224).
    big = jax.random.randint(k4, (1, 96, 224, 3), 0, 256, dtype=jnp.int32).astype(jnp.uint8)
    out_big = jax.block_until_ready(pil_to_numpy(big, like_to_tensor=True))
    assert out_big.shape == (1, 3, 96, 224) and out_big.dtype == jnp.float32
    assert jnp.allclose(out_big, ref_to_tensor(big), atol=1e-6)

    # 5) like_to_tensor=False: uint8 HWC passthrough (no kernel launched).
    out_id = jax.block_until_ready(PILToNumpy(like_to_tensor=False)(img))
    assert out_id.shape == (16, 16, 3) and out_id.dtype == jnp.uint8
    assert jnp.array_equal(out_id, img)

    print("KERNEL_OK")
</pallas_src>

<mosaic_0001>
module attributes {stable_mosaic.version = 11 : i64} {
  func.func @kernel(%arg0: i32, %arg1: i32, %arg2: i32, %arg3: memref<1x16x16xi32, #tpu.memory_space<vmem>>, %arg4: memref<1x3x16x16xf32, #tpu.memory_space<vmem>>) attributes {dimension_semantics = [#tpu.dimension_semantics<parallel>, #tpu.dimension_semantics<parallel>, #tpu.dimension_semantics<parallel>], iteration_bounds = array<i64: 1, 1, 1>, scalar_prefetch = 0 : i64, scratch_operands = 0 : i64, tpu.core_type = #tpu.core_type<tc>, window_params = [{transform_indices = @transform_0, window_bounds = array<i64: 1, 16, 16>}, {transform_indices = @transform_1, window_bounds = array<i64: 1, 3, 16, 16>}]} {
    %c0 = arith.constant 0 : index
    %c0_0 = arith.constant 0 : index
    %c0_1 = arith.constant 0 : index
    %0 = vector.load %arg3[%c0, %c0_0, %c0_1] : memref<1x16x16xi32, #tpu.memory_space<vmem>>, vector<1x16x16xi32>
    %1 = vector.shape_cast %0 : vector<1x16x16xi32> to vector<16x16xi32>
    %c0_i32 = arith.constant 0 : i32
    %2 = vector.broadcast %c0_i32 : i32 to vector<16x16xi32>
    %3 = arith.shrsi %1, %2 : vector<16x16xi32>
    %c255_i32 = arith.constant 255 : i32
    %4 = vector.broadcast %c255_i32 : i32 to vector<16x16xi32>
    %5 = arith.andi %3, %4 : vector<16x16xi32>
    %6 = arith.sitofp %5 : vector<16x16xi32> to vector<16x16xf32>
    %cst = arith.constant 0.00392156886 : f32
    %7 = vector.broadcast %cst : f32 to vector<16x16xf32>
    %8 = arith.mulf %6, %7 : vector<16x16xf32>
    %c0_2 = arith.constant 0 : index
    %c0_3 = arith.constant 0 : index
    %c0_4 = arith.constant 0 : index
    %c0_5 = arith.constant 0 : index
    %9 = vector.load %arg4[%c0_2, %c0_3, %c0_4, %c0_5] : memref<1x3x16x16xf32, #tpu.memory_space<vmem>>, vector<1x1x16x16xf32>
    %10 = vector.shape_cast %9 : vector<1x1x16x16xf32> to vector<16x16xf32>
    %11 = vector.shape_cast %8 : vector<16x16xf32> to vector<1x1x16x16xf32>
    tpu.vector_store %arg4[%c0_2, %c0_3, %c0_4, %c0_5], %11 {strides = array<i32>} : memref<1x3x16x16xf32, #tpu.memory_space<vmem>>, vector<1x1x16x16xf32>,
    %c8_i32 = arith.constant 8 : i32
    %12 = vector.broadcast %c8_i32 : i32 to vector<16x16xi32>
    %13 = arith.shrsi %1, %12 : vector<16x16xi32>
    %c255_i32_6 = arith.constant 255 : i32
    %14 = vector.broadcast %c255_i32_6 : i32 to vector<16x16xi32>
    %15 = arith.andi %13, %14 : vector<16x16xi32>
    %16 = arith.sitofp %15 : vector<16x16xi32> to vector<16x16xf32>
    %cst_7 = arith.constant 0.00392156886 : f32
    %17 = vector.broadcast %cst_7 : f32 to vector<16x16xf32>
    %18 = arith.mulf %16, %17 : vector<16x16xf32>
    %c0_8 = arith.constant 0 : index
    %c1 = arith.constant 1 : index
    %c0_9 = arith.constant 0 : index
    %c0_10 = arith.constant 0 : index
    %19 = vector.load %arg4[%c0_8, %c1, %c0_9, %c0_10] : memref<1x3x16x16xf32, #tpu.memory_space<vmem>>, vector<1x1x16x16xf32>
    %20 = vector.shape_cast %19 : vector<1x1x16x16xf32> to vector<16x16xf32>
    %21 = vector.shape_cast %18 : vector<16x16xf32> to vector<1x1x16x16xf32>
    tpu.vector_store %arg4[%c0_8, %c1, %c0_9, %c0_10], %21 {strides = array<i32>} : memref<1x3x16x16xf32, #tpu.memory_space<vmem>>, vector<1x1x16x16xf32>,
    %c16_i32 = arith.constant 16 : i32
    %22 = vector.broadcast %c16_i32 : i32 to vector<16x16xi32>
    %23 = arith.shrsi %1, %22 : vector<16x16xi32>
    %c255_i32_11 = arith.constant 255 : i32
    %24 = vector.broadcast %c255_i32_11 : i32 to vector<16x16xi32>
    %25 = arith.andi %23, %24 : vector<16x16xi32>
    %26 = arith.sitofp %25 : vector<16x16xi32> to vector<16x16xf32>
    %cst_12 = arith.constant 0.00392156886 : f32
    %27 = vector.broadcast %cst_12 : f32 to vector<16x16xf32>
    %28 = arith.mulf %26, %27 : vector<16x16xf32>
    %c0_13 = arith.constant 0 : index
    %c2 = arith.constant 2 : index
    %c0_14 = arith.constant 0 : index
    %c0_15 = arith.constant 0 : index
    %29 = vector.load %arg4[%c0_13, %c2, %c0_14, %c0_15] : memref<1x3x16x16xf32, #tpu.memory_space<vmem>>, vector<1x1x16x16xf32>
    %30 = vector.shape_cast %29 : vector<1x1x16x16xf32> to vector<16x16xf32>
    %31 = vector.shape_cast %28 : vector<16x16xf32> to vector<1x1x16x16xf32>
    tpu.vector_store %arg4[%c0_13, %c2, %c0_14, %c0_15], %31 {strides = array<i32>} : memref<1x3x16x16xf32, #tpu.memory_space<vmem>>, vector<1x1x16x16xf32>,
    return
  }
  func.func @transform_0(%arg0: i32, %arg1: i32, %arg2: i32) -> (i32, i32, i32) {
    %c0_i32 = arith.constant 0 : i32
    return %arg0, %arg1, %arg2 : i32, i32, i32
  }
  func.func @transform_1(%arg0: i32, %arg1: i32, %arg2: i32) -> (i32, i32, i32, i32) {
    %c0_i32 = arith.constant 0 : i32
    %c0_i32_0 = arith.constant 0 : i32
    return %arg0, %c0_i32, %arg1, %arg2 : i32, i32, i32, i32
  }
}

</mosaic_0001>

<llo_original>
// kernel: tpu_custom_call.1
$region0: #{tpu_custom_call.1}
  #allocation0 [shape = 'u32[]', space=smem, size = 0x4, offset = 0x4, fixed_abs, tag = 'smem constant byte address 0x4 - core index']
  #allocation1 [shape = 'u32[144,128]{1,0:T(1,128)}', space=vmem, size = 0x12000, scoped, tag = 'internal scratch']
  %s0 = inlined_call_operand.hbm [shape: s32[1,16,16], index: 0, kind: input, shape index: {}]
  %s1 = inlined_call_operand.hbm [shape: f32[1,3,16,16], index: 1, kind: output, shape index: {}]
  %s2 = sld [smem:[#allocation0]]
  $region18: #{tpu_custom_call.1} parent=0
    _
  %s4 = ssub.s32 1, %s2
  %s5 = scalar_select 0, %s4, %s2
  $region1: #{tpu_custom_call.1} parent=0
    #allocation2 [shape = 'u8[8192]{0}', space=vmem, size = 0x2000, scoped, tag = 'input window, operand 0, single buffered']
    #allocation3 [shape = 's32[1]{0}', space=sflag, size = 0x4, scoped, tag = 'scoped memory for tpu_custom_call.1']
    #allocation4 [shape = 's32[1]{0}', space=sflag, size = 0x4, scoped, tag = 'scoped memory for tpu_custom_call.1']
    #allocation5 [shape = 'u8[24576]{0}', space=vmem, size = 0x6000, scoped, tag = 'output window, operand 0, single buffered']
    %6 = vsyncpa [#allocation3], 0
    %7 = vsyncpa [#allocation4], 0
    // Predicated region
    $region2: #{tpu_custom_call.1} parent=1 // pred_check
      _
    $region3: #{tpu_custom_call.1} parent=1 // pred_check_branch
      %9 = sbr.rel (0) target = $region5
    $region4: #{tpu_custom_call.1} parent=1 // pred_region
      %s11 = ssub.s32 256, 256
      %12 = vsyncadd [#allocation3], %s11
      %s13 = sshll.u32 [#allocation2], 4
      %s14 = int_to_ptr.vmem [resolvable:$true] %s13
      %19 = dma.hbm_to_vmem [thread:$0]  %s0, 256, %s14, [#allocation3], 128, 128, 8
    $region5: #{tpu_custom_call.1} parent=1 // pred_fallthru
      _
    // Predicated region
    $region6: #{tpu_custom_call.1} parent=1 // pred_check
      _
    $region7: #{tpu_custom_call.1} parent=1 // pred_check_branch
      %21 = sbr.rel (0) target = $region9
    $region8: #{tpu_custom_call.1} parent=1 // pred_region
      %22 = dma.done [#allocation3], 256
    $region9: #{tpu_custom_call.1} parent=1 // pred_fallthru
      _
    %v23 = vld [vmem:[#allocation2] sm:$0xff]
    %v24 = vld [vmem:[#allocation2 + $0x8] sm:$0xff]
    %v25 = vand.u32 %v23, 255
    %v26 = vand.u32 %v24, 255
    %v27 = vcvt.s32.f32 %v25
    %v28 = vcvt.s32.f32 %v26
    %v29 = vmul.f32 %v27, 0.003921569
    %v30 = vmul.f32 %v28, 0.003921569
    %vm31 = vcmask 130048
    %32 = vst.msk [vmem:[#allocation5] sm:$0xff] %vm31, %v29
    %33 = vst.msk [vmem:[#allocation5 + $0x8] sm:$0xff] %vm31, %v30
    %v34 = vshra.s32 %v23, 8
    %v35 = vshra.s32 %v24, 8
    %v36 = vand.u32 %v34, 255
    %v37 = vand.u32 %v35, 255
    %v38 = vcvt.s32.f32 %v36
    %v39 = vcvt.s32.f32 %v37
    %v40 = vmul.f32 %v38, 0.003921569
    %v41 = vmul.f32 %v39, 0.003921569
    %s42 = scalar_lea.vmem [#allocation5], 16
    %43 = vst.msk [vmem:[%s42] sm:$0xff] %vm31, %v40
    %44 = vst.msk [vmem:[%s42 + $0x8] sm:$0xff] %vm31, %v41
    %v45 = vshra.s32 %v23, 16
    %v46 = vshra.s32 %v24, 16
    %v47 = vand.u32 %v45, 255
    %v48 = vand.u32 %v46, 255
    %v49 = vcvt.s32.f32 %v47
    %v50 = vcvt.s32.f32 %v48
    %v51 = vmul.f32 %v49, 0.003921569
    %v52 = vmul.f32 %v50, 0.003921569
    %s53 = scalar_lea.vmem [#allocation5], 32
    %54 = vst.msk [vmem:[%s53] sm:$0xff] %vm31, %v51
    %55 = vst.msk [vmem:[%s53 + $0x8] sm:$0xff] %vm31, %v52
    // Predicated region
    $region10: #{tpu_custom_call.1} parent=1 // pred_check
      _
    $region11: #{tpu_custom_call.1} parent=1 // pred_check_branch
      %57 = sbr.rel (0) target = $region13
    $region12: #{tpu_custom_call.1} parent=1 // pred_region
      %s59 = ssub.s32 768, 768
      %60 = vsyncadd [#allocation4], %s59
      %s61 = sshll.u32 [#allocation5], 4
      %s62 = int_to_ptr.vmem [resolvable:$true] %s61
      %67 = dma.vmem_to_hbm [thread:$0]  %s62, 768, %s1, [#allocation4], 128, 128, 8
    $region13: #{tpu_custom_call.1} parent=1 // pred_fallthru
      _
    // Predicated region
    $region14: #{tpu_custom_call.1} parent=1 // pred_check
      _
    $region15: #{tpu_custom_call.1} parent=1 // pred_check_branch
      %69 = sbr.rel (0) target = $region17
    $region16: #{tpu_custom_call.1} parent=1 // pred_region
      %70 = dma.done [#allocation4], 768
    $region17: #{tpu_custom_call.1} parent=1 // pred_fallthru
      _
    %71 = vsyncpa [#allocation3], 1
    %72 = vsyncpa [#allocation4], 1

</llo_original>
